<compile_context>
chip_gen: v5e
topology: v5e:2x2
jax: 0.10.0
libtpu: 0.0.40
codegen_flags: <defaults>
</compile_context>

<pallas_src>
import math

import jax
import jax.numpy as jnp
from jax import lax
from jax.experimental import pallas as pl
from jax.experimental.pallas import tpu as pltpu

_EPS = 1e-7
_LANES = 128
_SUBLANES = 8
_SMALL_ROWS = 512          # rows (of 128 lanes) threshold for the batch-tiled path
_DEFAULT_RPC = 2048        # feature-axis rows per chunk (1 MiB f32 per input block)


def _round_up(v, m):
    return -(-v // m) * m


# ----------------------------------------------------------------------------
# Small-N path: one grid step handles TB whole samples, block (TB, N).
# ----------------------------------------------------------------------------
def _make_batch_kernel(c):
    c_f = float(c)
    two_c = 2.0 * c_f
    inv_sqrt_c = 1.0 / math.sqrt(c_f)

    def kernel(x_ref, y_ref, o_ref):
        x = x_ref[...].astype(jnp.float32)          # (TB, N)
        y = y_ref[...].astype(jnp.float32)
        d = x - y
        sq = jnp.sum(d * d, axis=1, keepdims=True)  # (TB, 1)
        xn = jnp.sum(x * x, axis=1, keepdims=True)
        yn = jnp.sum(y * y, axis=1, keepdims=True)

        denom = jnp.maximum((1.0 - c_f * xn) * (1.0 - c_f * yn), _EPS)
        delta = jnp.maximum(two_c * sq / denom, 0.0)
        # acosh(1 + delta) = log1p(delta + sqrt(delta * (delta + 2)))
        acosh = jnp.log1p(delta + jnp.sqrt(delta * (delta + 2.0)))
        o_ref[...] = (acosh * inv_sqrt_c).astype(o_ref.dtype)

    return kernel


# ----------------------------------------------------------------------------
# Large-N path: grid (B, num_chunks), fused fori_loop over (8,128) groups.
# ----------------------------------------------------------------------------
def _make_chunk_kernel(c, rpc, rows_total, needs_mask, unroll):
    c_f = float(c)
    two_c = 2.0 * c_f
    inv_sqrt_c = 1.0 / math.sqrt(c_f)
    groups = rpc // _SUBLANES   # static, rpc % 8 == 0

    def kernel(x_ref, y_ref, o_ref, sq_acc, xn_acc, yn_acc):
        # x_ref, y_ref: VMEM (rpc, 128) chunk of one sample (native dtype)
        # o_ref:        VMEM (1, 1) per-sample distance
        # *_acc:        VMEM (8, 128) f32 per-lane partial-sum accumulators
        k = pl.program_id(1)
        last = pl.num_programs(1) - 1

        @pl.when(k == 0)
        def _init():
            sq_acc[...] = jnp.zeros_like(sq_acc)
            xn_acc[...] = jnp.zeros_like(xn_acc)
            yn_acc[...] = jnp.zeros_like(yn_acc)

        def accumulate(mask_rows):
            # Hoisted outside the fori body (JAX does not CSE broadcasts).
            if mask_rows:
                sub = lax.broadcasted_iota(jnp.int32, (_SUBLANES, _LANES), 0)
                row0 = k * rpc
            else:
                sub = None
                row0 = None

            def body(g, carry):
                sq, xn, yn = carry
                base = pl.multiple_of(g * _SUBLANES, _SUBLANES)
                xg = x_ref[pl.ds(base, _SUBLANES), :].astype(jnp.float32)
                yg = y_ref[pl.ds(base, _SUBLANES), :].astype(jnp.float32)
                if mask_rows:
                    valid = (row0 + g * _SUBLANES + sub) < rows_total
                    xg = jnp.where(valid, xg, 0.0)
                    yg = jnp.where(valid, yg, 0.0)
                d = xg - yg
                return (sq + d * d, xn + xg * xg, yn + yg * yg)

            init = (sq_acc[...], xn_acc[...], yn_acc[...])
            sq, xn, yn = lax.fori_loop(0, groups, body, init, unroll=unroll)
            sq_acc[...] = sq
            xn_acc[...] = xn
            yn_acc[...] = yn

        if needs_mask:
            # Only the last chunk pays for the row mask; the hot path is clean.
            @pl.when(k != last)
            def _():
                accumulate(False)

            @pl.when(k == last)
            def _():
                accumulate(True)
        else:
            accumulate(False)

        @pl.when(k == last)
        def _finalize():
            sq = jnp.sum(sq_acc[...], keepdims=True)   # (1, 1)
            xn = jnp.sum(xn_acc[...], keepdims=True)
            yn = jnp.sum(yn_acc[...], keepdims=True)

            denom = jnp.maximum((1.0 - c_f * xn) * (1.0 - c_f * yn), _EPS)
            delta = jnp.maximum(two_c * sq / denom, 0.0)
            acosh = jnp.log1p(delta + jnp.sqrt(delta * (delta + 2.0)))
            o_ref[...] = (acosh * inv_sqrt_c).astype(o_ref.dtype)

    return kernel


# ----------------------------------------------------------------------------
# Wrapper
# ----------------------------------------------------------------------------
def hyperbolic_distance(logits, targets, c=0.1, rows_per_chunk=_DEFAULT_RPC):
    """Poincare-ball hyperbolic distance loss (batch mean).

    Args:
      logits:  [B, ...] model output (any trailing feature shape, native dtype).
      targets: [B, ...] target, same shape as logits.
      c:       curvature (compile-time python float).
      rows_per_chunk: max feature-axis tile height (rows of 128 lanes) for the
        large-N chunked path.

    Returns:
      scalar f32 loss.
    """
    assert logits.shape == targets.shape, (logits.shape, targets.shape)
    B = logits.shape[0]
    N = int(math.prod(logits.shape[1:]))

    x = logits.reshape(B, N)      # native dtype, no wrapper-side upcast
    y = targets.reshape(B, N)

    rows_total = -(-N // _LANES)  # ceil(N / 128)

    # ------------------------------------------------------------------ small
    if rows_total <= _SMALL_ROWS:
        # Batch-tiled: (TB, N) blocks, block last dim == full dim -> works for
        # arbitrary N with no padding at all.  Per-sample f32 working set
        # budgeted at ~512 KiB so temporaries stay well under scoped VMEM.
        per_sample_f32 = max(N * 4, 1)
        tb = max(1, min(B, (512 * 1024) // per_sample_f32))
        if 8 < tb < B:
            tb = (tb // _SUBLANES) * _SUBLANES
        num_tiles = -(-B // tb)

        out = pl.pallas_call(
            _make_batch_kernel(c),
            out_shape=jax.ShapeDtypeStruct((num_tiles * tb, 1), jnp.float32),
            grid_spec=pltpu.PrefetchScalarGridSpec(
                num_scalar_prefetch=0,
                grid=(num_tiles,),
                in_specs=[
                    pl.BlockSpec((tb, N), lambda i: (i, 0)),
                    pl.BlockSpec((tb, N), lambda i: (i, 0)),
                ],
                out_specs=pl.BlockSpec((tb, 1), lambda i: (i, 0)),
            ),
            compiler_params=pltpu.CompilerParams(
                dimension_semantics=("parallel",)),
        )(x, y)
        return jnp.mean(out[:B, 0])

    # ---------------------------------------------------------------- chunked
    n_pad = rows_total * _LANES
    if n_pad != N:
        # TODO(synk): minimal pad (< 128 elems/sample) to allow the (rows, 128)
        # reshape; the row-block tail is handled in-kernel so there is no pad
        # up to the chunk boundary.
        x = jnp.pad(x, ((0, 0), (0, n_pad - N)))
        y = jnp.pad(y, ((0, 0), (0, n_pad - N)))
    x3 = x.reshape(B, rows_total, _LANES)
    y3 = y.reshape(B, rows_total, _LANES)

    # Adaptive chunk height: over-pad per chunk is < 8 rows.
    rpc_max = max(_SUBLANES, int(rows_per_chunk))
    num_chunks = -(-rows_total // rpc_max)
    rpc = _round_up(-(-rows_total // num_chunks), _SUBLANES)
    num_chunks = -(-rows_total // rpc)
    needs_mask = (num_chunks * rpc != rows_total)

    groups = rpc // _SUBLANES
    unroll = 1
    for u in (8, 4, 2, 1):
        if groups % u == 0:
            unroll = u
            break

    kernel = _make_chunk_kernel(c, rpc, rows_total, needs_mask, unroll)

    per_sample = pl.pallas_call(
        kernel,
        out_shape=jax.ShapeDtypeStruct((B, 1), jnp.float32),
        grid_spec=pltpu.PrefetchScalarGridSpec(
            num_scalar_prefetch=0,
            grid=(B, num_chunks),
            in_specs=[
                pl.BlockSpec((None, rpc, _LANES), lambda b, k: (b, k, 0)),
                pl.BlockSpec((None, rpc, _LANES), lambda b, k: (b, k, 0)),
            ],
            out_specs=pl.BlockSpec((1, 1), lambda b, k: (b, 0)),
            scratch_shapes=[
                pltpu.VMEM((_SUBLANES, _LANES), jnp.float32),
                pltpu.VMEM((_SUBLANES, _LANES), jnp.float32),
                pltpu.VMEM((_SUBLANES, _LANES), jnp.float32),
            ],
        ),
        compiler_params=pltpu.CompilerParams(
            dimension_semantics=("parallel", "arbitrary")),
    )(x3, y3)

    return jnp.mean(per_sample)


# ----------------------------------------------------------------------------
# Pure-JAX reference for validation
# ----------------------------------------------------------------------------
def _reference(logits, targets, c=0.1):
    B = logits.shape[0]
    x = logits.reshape(B, -1).astype(jnp.float32)
    y = targets.reshape(B, -1).astype(jnp.float32)
    sq = jnp.sum((x - y) ** 2, axis=-1)
    xn = jnp.sum(x * x, axis=-1)
    yn = jnp.sum(y * y, axis=-1)
    denom = jnp.maximum((1.0 - c * xn) * (1.0 - c * yn), _EPS)
    delta = jnp.maximum(2.0 * c * sq / denom, 0.0)
    d = jnp.log1p(delta + jnp.sqrt(delta * (delta + 2.0))) / math.sqrt(c)
    return jnp.mean(d)


if __name__ == "__main__":
    root = jax.random.PRNGKey(0)

    def make_case(key, shape, dtype):
        k1, k2 = jax.random.split(key)
        n = int(math.prod(shape[1:]))
        scale = 0.7 / math.sqrt(n)    # keep points well inside the c=0.1 ball
        a = (scale * jax.random.normal(k1, shape)).astype(dtype)
        b = (scale * jax.random.normal(k2, shape)).astype(dtype)
        return a, b

    cases = [
        # (shape, dtype, extra kwargs) — exercises both paths & edge handling
        ((2, 4, 16, 16), jnp.float32, {}),                 # batch path, aligned
        ((3, 1000),      jnp.float32, {}),                 # batch path, lane-unaligned, no pad
        ((5, 65536),     jnp.bfloat16, {}),                # batch path, partial batch tile, bf16
        ((2, 149999),    jnp.float32, {"rows_per_chunk": 512}),  # chunked, masked tail, multi-chunk
        ((2, 524288),    jnp.float32, {}),                 # chunked, aligned, unrolled fused loop
    ]

    keys = jax.random.split(root, len(cases))
    for kk, (shape, dtype, kw) in zip(keys, cases):
        a, b = make_case(kk, shape, dtype)
        out = jax.block_until_ready(hyperbolic_distance(a, b, c=0.1, **kw))
        ref = jax.block_until_ready(_reference(a, b, c=0.1))
        assert jnp.isfinite(out), ("non-finite output", shape)
        assert jnp.allclose(out, ref, rtol=5e-4, atol=1e-6), (shape, out, ref)

    print("KERNEL_OK")
</pallas_src>

<mosaic_0001>
module attributes {stable_mosaic.version = 11 : i64} {
  func.func @kernel(%arg0: i32, %arg1: memref<2x1024xf32, #tpu.memory_space<vmem>>, %arg2: memref<2x1024xf32, #tpu.memory_space<vmem>>, %arg3: memref<2x1xf32, #tpu.memory_space<vmem>>) attributes {dimension_semantics = [#tpu.dimension_semantics<parallel>], iteration_bounds = array<i64: 1>, scalar_prefetch = 0 : i64, scratch_operands = 0 : i64, tpu.core_type = #tpu.core_type<tc>, window_params = [{transform_indices = @transform_0, window_bounds = array<i64: 2, 1024>}, {transform_indices = @transform_1, window_bounds = array<i64: 2, 1024>}, {transform_indices = @transform_2, window_bounds = array<i64: 2, 1>}]} {
    %c0 = arith.constant 0 : index
    %c0_0 = arith.constant 0 : index
    %0 = vector.load %arg1[%c0, %c0_0] : memref<2x1024xf32, #tpu.memory_space<vmem>>, vector<2x1024xf32>
    %c0_1 = arith.constant 0 : index
    %c0_2 = arith.constant 0 : index
    %1 = vector.load %arg2[%c0_1, %c0_2] : memref<2x1024xf32, #tpu.memory_space<vmem>>, vector<2x1024xf32>
    %2 = arith.subf %0, %1 : vector<2x1024xf32>
    %3 = arith.mulf %2, %2 : vector<2x1024xf32>
    %cst = arith.constant dense<0.000000e+00> : vector<2xf32>
    %4 = vector.multi_reduction <add>, %3, %cst [1] : vector<2x1024xf32> to vector<2xf32>
    %5 = vector.shape_cast %4 : vector<2xf32> to vector<2x1xf32>
    %6 = arith.mulf %0, %0 : vector<2x1024xf32>
    %cst_3 = arith.constant dense<0.000000e+00> : vector<2xf32>
    %7 = vector.multi_reduction <add>, %6, %cst_3 [1] : vector<2x1024xf32> to vector<2xf32>
    %8 = vector.shape_cast %7 : vector<2xf32> to vector<2x1xf32>
    %9 = arith.mulf %1, %1 : vector<2x1024xf32>
    %cst_4 = arith.constant dense<0.000000e+00> : vector<2xf32>
    %10 = vector.multi_reduction <add>, %9, %cst_4 [1] : vector<2x1024xf32> to vector<2xf32>
    %11 = vector.shape_cast %10 : vector<2xf32> to vector<2x1xf32>
    %cst_5 = arith.constant 1.000000e-01 : f32
    %12 = vector.broadcast %cst_5 : f32 to vector<2x1xf32>
    %13 = arith.mulf %12, %8 : vector<2x1xf32>
    %cst_6 = arith.constant 1.000000e+00 : f32
    %14 = vector.broadcast %cst_6 : f32 to vector<2x1xf32>
    %15 = arith.subf %14, %13 : vector<2x1xf32>
    %cst_7 = arith.constant 1.000000e-01 : f32
    %16 = vector.broadcast %cst_7 : f32 to vector<2x1xf32>
    %17 = arith.mulf %16, %11 : vector<2x1xf32>
    %cst_8 = arith.constant 1.000000e+00 : f32
    %18 = vector.broadcast %cst_8 : f32 to vector<2x1xf32>
    %19 = arith.subf %18, %17 : vector<2x1xf32>
    %20 = arith.mulf %15, %19 : vector<2x1xf32>
    %cst_9 = arith.constant 1.000000e-07 : f32
    %21 = vector.broadcast %cst_9 : f32 to vector<2x1xf32>
    %22 = arith.maximumf %20, %21 : vector<2x1xf32>
    %cst_10 = arith.constant 2.000000e-01 : f32
    %23 = vector.broadcast %cst_10 : f32 to vector<2x1xf32>
    %24 = arith.mulf %23, %5 : vector<2x1xf32>
    %25 = arith.divf %24, %22 : vector<2x1xf32>
    %cst_11 = arith.constant 0.000000e+00 : f32
    %26 = vector.broadcast %cst_11 : f32 to vector<2x1xf32>
    %27 = arith.maximumf %25, %26 : vector<2x1xf32>
    %cst_12 = arith.constant 2.000000e+00 : f32
    %28 = vector.broadcast %cst_12 : f32 to vector<2x1xf32>
    %29 = arith.addf %27, %28 : vector<2x1xf32>
    %30 = arith.mulf %27, %29 : vector<2x1xf32>
    %31 = math.sqrt %30 : vector<2x1xf32>
    %32 = arith.addf %27, %31 : vector<2x1xf32>
    %33 = math.log1p %32 : vector<2x1xf32>
    %cst_13 = arith.constant 3.1622777 : f32
    %34 = vector.broadcast %cst_13 : f32 to vector<2x1xf32>
    %35 = arith.mulf %33, %34 : vector<2x1xf32>
    %c0_14 = arith.constant 0 : index
    %c0_15 = arith.constant 0 : index
    %36 = vector.load %arg3[%c0_14, %c0_15] : memref<2x1xf32, #tpu.memory_space<vmem>>, vector<2x1xf32>
    tpu.vector_store %arg3[%c0_14, %c0_15], %35 {strides = array<i32>} : memref<2x1xf32, #tpu.memory_space<vmem>>, vector<2x1xf32>,
    return
  }
  func.func @transform_0(%arg0: i32) -> (i32, i32) {
    %c0_i32 = arith.constant 0 : i32
    %c0_i32_0 = arith.constant 0 : i32
    return %arg0, %c0_i32 : i32, i32
  }
  func.func @transform_1(%arg0: i32) -> (i32, i32) {
    %c0_i32 = arith.constant 0 : i32
    %c0_i32_0 = arith.constant 0 : i32
    return %arg0, %c0_i32 : i32, i32
  }
  func.func @transform_2(%arg0: i32) -> (i32, i32) {
    %c0_i32 = arith.constant 0 : i32
    %c0_i32_0 = arith.constant 0 : i32
    return %arg0, %c0_i32 : i32, i32
  }
}

</mosaic_0001>

<llo_original>
// kernel: tpu_custom_call.1
$region0: #{tpu_custom_call.1}
  #allocation0 [shape = 'u32[]', space=smem, size = 0x4, offset = 0x4, fixed_abs, tag = 'smem constant byte address 0x4 - core index']
  #allocation1 [shape = 'u32[72,128]{1,0:T(1,128)}', space=vmem, size = 0x9000, scoped, tag = 'internal scratch']
  %s0 = inlined_call_operand.hbm [shape: f32[2,1024], index: 0, kind: input, shape index: {}]
  %s1 = inlined_call_operand.hbm [shape: f32[2,1024], index: 1, kind: input, shape index: {}]
  %s2 = inlined_call_operand.vmem [shape: f32[2,1], index: 2, kind: output, shape index: {}]
  %s3 = sld [smem:[#allocation0]]
  $region26: #{tpu_custom_call.1} parent=0
    _
  %s5 = ssub.s32 1, %s3
  %s6 = scalar_select 0, %s5, %s3
  $region1: #{tpu_custom_call.1} parent=0
    #allocation2 [shape = 'u8[8192]{0}', space=vmem, size = 0x2000, scoped, tag = 'input window, operand 0, single buffered']
    #allocation3 [shape = 's32[1]{0}', space=sflag, size = 0x4, scoped, tag = 'scoped memory for tpu_custom_call.1']
    #allocation4 [shape = 'u8[8192]{0}', space=vmem, size = 0x2000, scoped, tag = 'input window, operand 1, single buffered']
    #allocation5 [shape = 's32[1]{0}', space=sflag, size = 0x4, scoped, tag = 'scoped memory for tpu_custom_call.1']
    %7 = vsyncpa [#allocation3], 0
    %8 = vsyncpa [#allocation5], 0
    // Predicated region
    $region2: #{tpu_custom_call.1} parent=1 // pred_check
      _
    $region3: #{tpu_custom_call.1} parent=1 // pred_check_branch
      %10 = sbr.rel (0) target = $region5
    $region4: #{tpu_custom_call.1} parent=1 // pred_region
      %12 = vsyncadd [#allocation3], 0
      %s14 = sshll.u32 %s0, 4
      %s15 = int_to_ptr.hbm [resolvable:$true] %s14
      %s16 = sshll.u32 [#allocation2], 4
      %s17 = int_to_ptr.vmem [resolvable:$true] %s16
      %19 = dma.hbm_to_vmem [thread:$0]  %s15, 256, %s17, [#allocation3]
    $region5: #{tpu_custom_call.1} parent=1 // pred_fallthru
      _
    // Predicated region
    $region6: #{tpu_custom_call.1} parent=1 // pred_check
      _
    $region7: #{tpu_custom_call.1} parent=1 // pred_check_branch
      %21 = sbr.rel (0) target = $region9
    $region8: #{tpu_custom_call.1} parent=1 // pred_region
      %23 = vsyncadd [#allocation5], 0
      %s25 = sshll.u32 %s1, 4
      %s26 = int_to_ptr.hbm [resolvable:$true] %s25
      %s27 = sshll.u32 [#allocation4], 4
      %s28 = int_to_ptr.vmem [resolvable:$true] %s27
      %30 = dma.hbm_to_vmem [thread:$0]  %s26, 256, %s28, [#allocation5]
    $region9: #{tpu_custom_call.1} parent=1 // pred_fallthru
      _
    // Predicated region
    $region10: #{tpu_custom_call.1} parent=1 // pred_check
      _
    $region11: #{tpu_custom_call.1} parent=1 // pred_check_branch
      %32 = sbr.rel (0) target = $region13
    $region12: #{tpu_custom_call.1} parent=1 // pred_region
      %34 = dma.done [#allocation3], 256
    $region13: #{tpu_custom_call.1} parent=1 // pred_fallthru
      _
    // Predicated region
    $region14: #{tpu_custom_call.1} parent=1 // pred_check
      _
    $region15: #{tpu_custom_call.1} parent=1 // pred_check_branch
      %36 = sbr.rel (0) target = $region17
    $region16: #{tpu_custom_call.1} parent=1 // pred_region
      %38 = dma.done [#allocation5], 256
    $region17: #{tpu_custom_call.1} parent=1 // pred_fallthru
      _
    %v39 = vld [vmem:[#allocation2] sm:$0xff]
    %v40 = vld [vmem:[#allocation2 + $0x8] sm:$0xff]
    %v41 = vld [vmem:[#allocation4] sm:$0xff]
    %v42 = vld [vmem:[#allocation4 + $0x8] sm:$0xff]
    %v43 = vsub.f32 %v39, %v41
    %v44 = vsub.f32 %v40, %v42
    %v45 = vmul.f32 %v43, %v43
    %v46 = vmul.f32 %v44, %v44
    %49 = vst [vmem:[#allocation1] ss:$4 sm:$0xff] %v45
    %s50 = scalar_lea.vmem [#allocation1], 32
    %51 = vst [vmem:[%s50] ss:$4 sm:$0xff] %v46
    %v52 = vld.sshfl [vmem:[#allocation1] sm:$0xff pattern:$0x73625140]
    %v53 = vld.sshfl [vmem:[#allocation1 + $0x8] sm:$0xff pattern:$0x73625140]
    %v54 = vld.sshfl [vmem:[#allocation1 + $0x10] sm:$0xff pattern:$0x73625140]
    %v55 = vld.sshfl [vmem:[#allocation1 + $0x18] sm:$0xff pattern:$0x73625140]
    %v56 = vld.sshfl [vmem:[#allocation1 + $0x20] sm:$0xff pattern:$0x73625140]
    %v57 = vld.sshfl [vmem:[#allocation1 + $0x28] sm:$0xff pattern:$0x73625140]
    %v58 = vld.sshfl [vmem:[#allocation1 + $0x30] sm:$0xff pattern:$0x73625140]
    %v59 = vld.sshfl [vmem:[#allocation1 + $0x38] sm:$0xff pattern:$0x73625140]
    %vm68 = vcmask 1041408
    %v69 = vsel %vm68, %v52, 0.0
    %v70 = vsel %vm68, %v53, 0.0
    %v71 = vadd.f32 %v69, %v70
    %v72 = vsel %vm68, %v54, 0.0
    %v73 = vadd.f32 %v71, %v72
    %v74 = vsel %vm68, %v55, 0.0
    %v75 = vadd.f32 %v73, %v74
    %v76 = vsel %vm68, %v56, 0.0
    %v77 = vadd.f32 %v75, %v76
    %v78 = vsel %vm68, %v57, 0.0
    %v79 = vadd.f32 %v77, %v78
    %v80 = vsel %vm68, %v58, 0.0
    %v81 = vadd.f32 %v79, %v80
    %v82 = vsel %vm68, %v59, 0.0
    %v83 = vadd.f32 %v81, %v82
    %84 = vadd.xlane.f32.xlu0 %v83
    %v85 = vpop.xlane.xlu0 %84
    %v86 = vmul.f32 %v39, %v39
    %v87 = vmul.f32 %v40, %v40
    %90 = vst [vmem:[#allocation1] ss:$4 sm:$0xff] %v86
    %s91 = scalar_lea.vmem [#allocation1], 32
    %92 = vst [vmem:[%s91] ss:$4 sm:$0xff] %v87
    %v93 = vld.sshfl [vmem:[#allocation1] sm:$0xff pattern:$0x73625140]
    %v94 = vld.sshfl [vmem:[#allocation1 + $0x8] sm:$0xff pattern:$0x73625140]
    %v95 = vld.sshfl [vmem:[#allocation1 + $0x10] sm:$0xff pattern:$0x73625140]
    %v96 = vld.sshfl [vmem:[#allocation1 + $0x18] sm:$0xff pattern:$0x73625140]
    %v97 = vld.sshfl [vmem:[#allocation1 + $0x20] sm:$0xff pattern:$0x73625140]
    %v98 = vld.sshfl [vmem:[#allocation1 + $0x28] sm:$0xff pattern:$0x73625140]
    %v99 = vld.sshfl [vmem:[#allocation1 + $0x30] sm:$0xff pattern:$0x73625140]
    %v100 = vld.sshfl [vmem:[#allocation1 + $0x38] sm:$0xff pattern:$0x73625140]
    %v109 = vsel %vm68, %v93, 0.0
    %v110 = vsel %vm68, %v94, 0.0
    %v111 = vadd.f32 %v109, %v110
    %v112 = vsel %vm68, %v95, 0.0
    %v113 = vadd.f32 %v111, %v112
    %v114 = vsel %vm68, %v96, 0.0
    %v115 = vadd.f32 %v113, %v114
    %v116 = vsel %vm68, %v97, 0.0
    %v117 = vadd.f32 %v115, %v116
    %v118 = vsel %vm68, %v98, 0.0
    %v119 = vadd.f32 %v117, %v118
    %v120 = vsel %vm68, %v99, 0.0
    %v121 = vadd.f32 %v119, %v120
    %v122 = vsel %vm68, %v100, 0.0
    %v123 = vadd.f32 %v121, %v122
    %124 = vadd.xlane.f32.xlu0 %v123
    %v125 = vpop.xlane.xlu0 %124
    %v126 = vmul.f32 %v41, %v41
    %v127 = vmul.f32 %v42, %v42
    %130 = vst [vmem:[#allocation1] ss:$4 sm:$0xff] %v126
    %s131 = scalar_lea.vmem [#allocation1], 32
    %132 = vst [vmem:[%s131] ss:$4 sm:$0xff] %v127
    %v133 = vld.sshfl [vmem:[#allocation1] sm:$0xff pattern:$0x73625140]
    %v134 = vld.sshfl [vmem:[#allocation1 + $0x8] sm:$0xff pattern:$0x73625140]
    %v135 = vld.sshfl [vmem:[#allocation1 + $0x10] sm:$0xff pattern:$0x73625140]
    %v136 = vld.sshfl [vmem:[#allocation1 + $0x18] sm:$0xff pattern:$0x73625140]
    %v137 = vld.sshfl [vmem:[#allocation1 + $0x20] sm:$0xff pattern:$0x73625140]
    %v138 = vld.sshfl [vmem:[#allocation1 + $0x28] sm:$0xff pattern:$0x73625140]
    %v139 = vld.sshfl [vmem:[#allocation1 + $0x30] sm:$0xff pattern:$0x73625140]
    %v140 = vld.sshfl [vmem:[#allocation1 + $0x38] sm:$0xff pattern:$0x73625140]
    %v149 = vsel %vm68, %v133, 0.0
    %v150 = vsel %vm68, %v134, 0.0
    %v151 = vadd.f32 %v149, %v150
    %v152 = vsel %vm68, %v135, 0.0
    %v153 = vadd.f32 %v151, %v152
    %v154 = vsel %vm68, %v136, 0.0
    %v155 = vadd.f32 %v153, %v154
    %v156 = vsel %vm68, %v137, 0.0
    %v157 = vadd.f32 %v155, %v156
    %v158 = vsel %vm68, %v138, 0.0
    %v159 = vadd.f32 %v157, %v158
    %v160 = vsel %vm68, %v139, 0.0
    %v161 = vadd.f32 %v159, %v160
    %v162 = vsel %vm68, %v140, 0.0
    %v163 = vadd.f32 %v161, %v162
    %164 = vadd.xlane.f32.xlu0 %v163
    %v165 = vpop.xlane.xlu0 %164
    %v166 = vmul.f32 %v125, 0.1
    %v167 = vsub.f32 1.0, %v166
    %v168 = vmul.f32 %v165, 0.1
    %v169 = vsub.f32 1.0, %v168
    %v170 = vmul.f32 %v167, %v169
    %v171 = vmax.f32 %v170, 1e-07
    %v172 = vmul.f32 %v85, 0.2
    %v173 = vrcp.pop %v171
    %v174 = vmul.f32 %v171, %v173
    %v175 = vsub.f32 1.0, %v174
    %v176 = vmul.f32 %v173, %v175
    %v177 = vadd.f32 %v173, %v176
    %vm178 = vweird.f32 %v171
    %vm179 = vweird.f32 %v173
    %vm180 = vmor %vm178, %vm179
    %v181 = vsel %vm180, %v173, %v177
    %v182 = vand.u32 2147483647, %v171
    %vm183 = vcmp.eq.f32.partialorder %v182, 8.507059e+37
    %v184 = vand.u32 %v171, 2147483648
    %v185 = vor.u32 1.1754944e-38, %v184
    %v186 = vsel %vm183, %v185, %v181
    %v187 = vmul.f32 %v172, %v186
    %v188 = vmax.f32 %v187, 0.0
    %v189 = vadd.f32 %v188, 2.0
    %v190 = vmul.f32 %v188, %v189
    %v191 = vrsqrt.pop %v190
    %v192 = vmul.f32 %v191, %v190
    %v193 = vmul.f32 %v192, %v191
    %v194 = vmul.f32 0.5, %v193
    %v195 = vsub.f32 1.5, %v194
    %v196 = vmul.f32 %v191, %v195
    %v197 = vmul.f32 %v190, %v196
    %vm198 = vcmp.eq.f32.partialorder %v190, inf
    %v199 = vsel %vm198, %v190, %v197
    %vm200 = vcmp.eq.f32.partialorder %v190, 0.0
    %v201 = vand.u32 %v190, 2147483648
    %v202 = vsel %vm200, %v201, %v199
    %v203 = vadd.f32 %v188, %v202
    %v204 = vadd.f32 %v203, 1.0
    %v205 = vlog2.pop %v204
    %v206 = vmul.f32 %v205, 0.6931472
    %v207 = vmul.f32 -0.5, %v203
    %v208 = vadd.f32 %v207, 1.0
    %v209 = vmul.f32 %v208, %v203
    %v210 = vand.u32 2147483647, %v203
    %vm211 = vcmp.lt.f32.partialorder %v210, 0.0004427343
    %v212 = vsel %vm211, %v209, %v206
    %v213 = vmul.f32 %v212, 3.1622777
    %vm214 = vcmask 1024
    %215 = vst.msk [vmem:[%s2] sm:$0x3] %vm214, %v213
    // Predicated region
    $region18: #{tpu_custom_call.1} parent=1 // pred_check
      _
    $region19: #{tpu_custom_call.1} parent=1 // pred_check_branch
      %217 = sbr.rel (0) target = $region21
    $region20: #{tpu_custom_call.1} parent=1 // pred_region
      _
    $region21: #{tpu_custom_call.1} parent=1 // pred_fallthru
      _
    // Predicated region
    $region22: #{tpu_custom_call.1} parent=1 // pred_check
      _
    $region23: #{tpu_custom_call.1} parent=1 // pred_check_branch
      %219 = sbr.rel (0) target = $region25
    $region24: #{tpu_custom_call.1} parent=1 // pred_region
      _
    $region25: #{tpu_custom_call.1} parent=1 // pred_fallthru
      _
    %220 = vsyncpa [#allocation3], 1
    %221 = vsyncpa [#allocation5], 1

</llo_original>
